<compile_context>
chip_gen: v5e
topology: v5e:2x2
jax: 0.10.0
libtpu: 0.0.40
codegen_flags: <defaults>
</compile_context>

<pallas_src>
import functools

import jax
import jax.numpy as jnp
from jax.experimental import pallas as pl
from jax.experimental.pallas import tpu as pltpu

LANES = 128
SUBLANES = 8
MAX_ROW_BLOCK = 2048      # (2048, 128) f32 = 1 MiB per input block per stream
NEG_FILL = -1.0e4         # 0.5*tanh(0.5*NEG_FILL)+0.5 == 0.0 exactly in f32


def _num_tensorcores():
    """Best-effort TensorCores per JAX device (megacore-style chips -> 2)."""
    try:
        kind = jax.devices()[0].device_kind.lower()
    except Exception:
        return 1
    for tag in ("v4", "v5p", "v7", "7x"):
        if tag in kind:
            return 2
    return 1


def _dice_partial_kernel(p_ref, t_ref, acc_ref, *, rows, row_block,
                         tiles_per_core, ragged):
    """Accumulate per-core partials [sum(p*t), sum(p), sum(t)] into a
    (1, 3, 8, 128) output block resident across the inner ("arbitrary") axis."""
    core = pl.program_id(0)
    step = pl.program_id(1)
    tile = core * tiles_per_core + step

    @pl.when(step == 0)
    def _():
        acc_ref[...] = jnp.zeros_like(acc_ref)

    x = p_ref[...].astype(jnp.float32)
    # sigmoid(x) == 0.5 * tanh(0.5 * x) + 0.5  (one EUP op + two VALU ops;
    # avoids the exp + divide expansion so v7x stays memory-bound).
    p = 0.5 * jnp.tanh(0.5 * x) + 0.5
    t = t_ref[...].astype(jnp.float32)

    def accumulate(pv, tv):
        # (row_block, 128) -> (row_block//8, 8, 128); reducing the leading axis
        # is pure VPU adds into one vreg-shaped (8,128) partial per quantity —
        # no per-step cross-lane/sublane XLU reduction.
        p3 = pv.reshape(row_block // SUBLANES, SUBLANES, LANES)
        t3 = tv.reshape(row_block // SUBLANES, SUBLANES, LANES)
        acc_ref[0, 0] += jnp.sum(p3 * t3, axis=0)
        acc_ref[0, 1] += jnp.sum(p3, axis=0)
        acc_ref[0, 2] += jnp.sum(t3, axis=0)

    if not ragged:
        accumulate(p, t)
    else:
        full_tiles = rows // row_block   # tiles fully inside the array

        @pl.when(tile < full_tiles)
        def _():
            accumulate(p, t)             # steady-state fast path: no mask work

        @pl.when(tile >= full_tiles)
        def _():
            # Ragged last tile / phantom tiles: row-only mask (no per-element
            # flat-index math, no int32 overflow for any realistic size).
            row = jax.lax.broadcasted_iota(jnp.int32, (row_block, LANES), 0)
            valid = (tile * row_block + row) < rows
            accumulate(jnp.where(valid, p, 0.0), jnp.where(valid, t, 0.0))


def binary_dice_loss(predictions, targets, smooth=1.0):
    """Pallas TPU implementation of BinaryDiceLoss.forward (returns scalar f32)."""
    p_flat = predictions.reshape(-1)
    t_flat = targets.reshape(-1)
    n = p_flat.shape[0]

    # Pad only up to (8,128)=1024-element alignment, and only when needed.
    # Fill values are neutral (sigmoid(NEG_FILL)==0, target pad==0), so the
    # lane/sublane tail never needs an in-kernel mask.
    align = SUBLANES * LANES
    pad = (-n) % align
    if pad:
        p_flat = jnp.pad(p_flat, (0, pad), constant_values=NEG_FILL)
        t_flat = jnp.pad(t_flat, (0, pad), constant_values=0)

    rows = (n + pad) // LANES            # multiple of SUBLANES
    p2 = p_flat.reshape(rows, LANES)     # contiguous reshape: no data movement
    t2 = t_flat.reshape(rows, LANES)

    row_block = min(MAX_ROW_BLOCK, rows)
    total_tiles = (rows + row_block - 1) // row_block

    num_cores = min(_num_tensorcores(), total_tiles)
    tiles_per_core = (total_tiles + num_cores - 1) // num_cores
    # The grid may overshoot the array (ragged last tile and/or phantom
    # tiles); those steps are masked in-kernel — never padded/copied in HBM.
    ragged = (rows % row_block != 0) or (num_cores * tiles_per_core != total_tiles)

    last_block = total_tiles - 1
    if num_cores * tiles_per_core == total_tiles:
        def in_map(c, i):
            return (c * tiles_per_core + i, 0)
    else:
        def in_map(c, i):
            # Clamp so phantom tiles (fully masked in-kernel) never DMA out of
            # bounds; they just re-read the last real block.
            return (jnp.minimum(c * tiles_per_core + i, last_block), 0)

    tile_spec = pl.BlockSpec((row_block, LANES), in_map)

    partials = pl.pallas_call(
        functools.partial(
            _dice_partial_kernel,
            rows=rows,
            row_block=row_block,
            tiles_per_core=tiles_per_core,
            ragged=ragged,
        ),
        out_shape=jax.ShapeDtypeStruct((num_cores, 3, SUBLANES, LANES),
                                       jnp.float32),
        grid_spec=pltpu.PrefetchScalarGridSpec(
            num_scalar_prefetch=0,
            grid=(num_cores, tiles_per_core),
            in_specs=[tile_spec, tile_spec],
            out_specs=pl.BlockSpec((1, 3, SUBLANES, LANES),
                                   lambda c, i: (c, 0, 0, 0)),
        ),
        compiler_params=pltpu.CompilerParams(
            dimension_semantics=("parallel", "arbitrary"),
            vmem_limit_bytes=32 * 1024 * 1024),
    )(p2, t2)

    # Tiny final combine (cross-core + cross-lane) and dice arithmetic.
    sums = jnp.sum(partials, axis=(0, 2, 3))          # (3,)
    inter, psum, tsum = sums[0], sums[1], sums[2]
    dice = (2.0 * inter + float(smooth)) / (psum + tsum + float(smooth))
    return 1.0 - dice


def _reference(predictions, targets, smooth=1.0):
    p = jax.nn.sigmoid(predictions.astype(jnp.float32)).reshape(-1)
    t = targets.astype(jnp.float32).reshape(-1)
    inter = jnp.sum(p * t)
    dice = (2.0 * inter + smooth) / (jnp.sum(p) + jnp.sum(t) + smooth)
    return 1.0 - dice


if __name__ == "__main__":
    key = jax.random.PRNGKey(0)
    k1, k2 = jax.random.split(key)
    # NCHW logits and binary targets, small shapes.
    x = jax.random.normal(k1, (2, 4, 16, 16), dtype=jnp.float32)
    y = (jax.random.uniform(k2, (2, 4, 16, 16)) > 0.5).astype(jnp.float32)

    loss = binary_dice_loss(x, y, smooth=1.0)
    loss = jax.block_until_ready(loss)

    ref = _reference(x, y, smooth=1.0)
    assert jnp.allclose(loss, ref, atol=1e-4, rtol=1e-4), (loss, ref)
    print("KERNEL_OK")
</pallas_src>

<mosaic_0001>
module attributes {stable_mosaic.version = 11 : i64} {
  func.func @_dice_partial_kernel(%arg0: i32, %arg1: i32, %arg2: memref<16x128xf32, #tpu.memory_space<vmem>>, %arg3: memref<16x128xf32, #tpu.memory_space<vmem>>, %arg4: memref<1x3x8x128xf32, #tpu.memory_space<vmem>>) attributes {dimension_semantics = [#tpu.dimension_semantics<parallel>, #tpu.dimension_semantics<arbitrary>], iteration_bounds = array<i64: 1, 1>, scalar_prefetch = 0 : i64, scratch_operands = 0 : i64, tpu.core_type = #tpu.core_type<tc>, window_params = [{transform_indices = @transform_0, window_bounds = array<i64: 16, 128>}, {transform_indices = @transform_1, window_bounds = array<i64: 16, 128>}, {transform_indices = @transform_2, window_bounds = array<i64: 1, 3, 8, 128>}]} {
    %c0_i32 = arith.constant 0 : i32
    %0 = arith.cmpi eq, %arg1, %c0_i32 : i32
    %1 = arith.extui %0 : i1 to i32
    %c0_i32_0 = arith.constant 0 : i32
    %2 = arith.cmpi ne, %1, %c0_i32_0 : i32
    scf.if %2 {
      %cst_31 = arith.constant 0.000000e+00 : f32
      %36 = vector.broadcast %cst_31 : f32 to vector<1x3x8x128xf32>
      %c0_32 = arith.constant 0 : index
      %c0_33 = arith.constant 0 : index
      %c0_34 = arith.constant 0 : index
      %c0_35 = arith.constant 0 : index
      %37 = vector.load %arg4[%c0_32, %c0_33, %c0_34, %c0_35] : memref<1x3x8x128xf32, #tpu.memory_space<vmem>>, vector<1x3x8x128xf32>
      tpu.vector_store %arg4[%c0_32, %c0_33, %c0_34, %c0_35], %36 {strides = array<i32>} : memref<1x3x8x128xf32, #tpu.memory_space<vmem>>, vector<1x3x8x128xf32>,
    } else {
    }
    %c0 = arith.constant 0 : index
    %c0_1 = arith.constant 0 : index
    %3 = vector.load %arg2[%c0, %c0_1] : memref<16x128xf32, #tpu.memory_space<vmem>>, vector<16x128xf32>
    %cst = arith.constant 5.000000e-01 : f32
    %4 = vector.broadcast %cst : f32 to vector<16x128xf32>
    %5 = arith.mulf %4, %3 : vector<16x128xf32>
    %6 = math.tanh %5 : vector<16x128xf32>
    %cst_2 = arith.constant 5.000000e-01 : f32
    %7 = vector.broadcast %cst_2 : f32 to vector<16x128xf32>
    %8 = arith.mulf %7, %6 : vector<16x128xf32>
    %cst_3 = arith.constant 5.000000e-01 : f32
    %9 = vector.broadcast %cst_3 : f32 to vector<16x128xf32>
    %10 = arith.addf %8, %9 : vector<16x128xf32>
    %c0_4 = arith.constant 0 : index
    %c0_5 = arith.constant 0 : index
    %11 = vector.load %arg3[%c0_4, %c0_5] : memref<16x128xf32, #tpu.memory_space<vmem>>, vector<16x128xf32>
    %12 = vector.shape_cast %10 : vector<16x128xf32> to vector<2x8x128xf32>
    %13 = vector.shape_cast %11 : vector<16x128xf32> to vector<2x8x128xf32>
    %c0_6 = arith.constant 0 : index
    %c0_7 = arith.constant 0 : index
    %c0_8 = arith.constant 0 : index
    %c0_9 = arith.constant 0 : index
    %14 = vector.load %arg4[%c0_6, %c0_7, %c0_8, %c0_9] : memref<1x3x8x128xf32, #tpu.memory_space<vmem>>, vector<1x1x8x128xf32>
    %15 = vector.shape_cast %14 : vector<1x1x8x128xf32> to vector<8x128xf32>
    %16 = arith.mulf %12, %13 : vector<2x8x128xf32>
    %cst_10 = arith.constant dense<0.000000e+00> : vector<8x128xf32>
    %17 = vector.multi_reduction <add>, %16, %cst_10 [0] : vector<2x8x128xf32> to vector<8x128xf32>
    %18 = arith.addf %15, %17 : vector<8x128xf32>
    %c0_11 = arith.constant 0 : index
    %c0_12 = arith.constant 0 : index
    %c0_13 = arith.constant 0 : index
    %c0_14 = arith.constant 0 : index
    %19 = vector.load %arg4[%c0_11, %c0_12, %c0_13, %c0_14] : memref<1x3x8x128xf32, #tpu.memory_space<vmem>>, vector<1x1x8x128xf32>
    %20 = vector.shape_cast %19 : vector<1x1x8x128xf32> to vector<8x128xf32>
    %21 = vector.shape_cast %18 : vector<8x128xf32> to vector<1x1x8x128xf32>
    tpu.vector_store %arg4[%c0_11, %c0_12, %c0_13, %c0_14], %21 {strides = array<i32>} : memref<1x3x8x128xf32, #tpu.memory_space<vmem>>, vector<1x1x8x128xf32>,
    %c0_15 = arith.constant 0 : index
    %c1 = arith.constant 1 : index
    %c0_16 = arith.constant 0 : index
    %c0_17 = arith.constant 0 : index
    %22 = vector.load %arg4[%c0_15, %c1, %c0_16, %c0_17] : memref<1x3x8x128xf32, #tpu.memory_space<vmem>>, vector<1x1x8x128xf32>
    %23 = vector.shape_cast %22 : vector<1x1x8x128xf32> to vector<8x128xf32>
    %cst_18 = arith.constant dense<0.000000e+00> : vector<8x128xf32>
    %24 = vector.multi_reduction <add>, %12, %cst_18 [0] : vector<2x8x128xf32> to vector<8x128xf32>
    %25 = arith.addf %23, %24 : vector<8x128xf32>
    %c0_19 = arith.constant 0 : index
    %c1_20 = arith.constant 1 : index
    %c0_21 = arith.constant 0 : index
    %c0_22 = arith.constant 0 : index
    %26 = vector.load %arg4[%c0_19, %c1_20, %c0_21, %c0_22] : memref<1x3x8x128xf32, #tpu.memory_space<vmem>>, vector<1x1x8x128xf32>
    %27 = vector.shape_cast %26 : vector<1x1x8x128xf32> to vector<8x128xf32>
    %28 = vector.shape_cast %25 : vector<8x128xf32> to vector<1x1x8x128xf32>
    tpu.vector_store %arg4[%c0_19, %c1_20, %c0_21, %c0_22], %28 {strides = array<i32>} : memref<1x3x8x128xf32, #tpu.memory_space<vmem>>, vector<1x1x8x128xf32>,
    %c0_23 = arith.constant 0 : index
    %c2 = arith.constant 2 : index
    %c0_24 = arith.constant 0 : index
    %c0_25 = arith.constant 0 : index
    %29 = vector.load %arg4[%c0_23, %c2, %c0_24, %c0_25] : memref<1x3x8x128xf32, #tpu.memory_space<vmem>>, vector<1x1x8x128xf32>
    %30 = vector.shape_cast %29 : vector<1x1x8x128xf32> to vector<8x128xf32>
    %cst_26 = arith.constant dense<0.000000e+00> : vector<8x128xf32>
    %31 = vector.multi_reduction <add>, %13, %cst_26 [0] : vector<2x8x128xf32> to vector<8x128xf32>
    %32 = arith.addf %30, %31 : vector<8x128xf32>
    %c0_27 = arith.constant 0 : index
    %c2_28 = arith.constant 2 : index
    %c0_29 = arith.constant 0 : index
    %c0_30 = arith.constant 0 : index
    %33 = vector.load %arg4[%c0_27, %c2_28, %c0_29, %c0_30] : memref<1x3x8x128xf32, #tpu.memory_space<vmem>>, vector<1x1x8x128xf32>
    %34 = vector.shape_cast %33 : vector<1x1x8x128xf32> to vector<8x128xf32>
    %35 = vector.shape_cast %32 : vector<8x128xf32> to vector<1x1x8x128xf32>
    tpu.vector_store %arg4[%c0_27, %c2_28, %c0_29, %c0_30], %35 {strides = array<i32>} : memref<1x3x8x128xf32, #tpu.memory_space<vmem>>, vector<1x1x8x128xf32>,
    return
  }
  func.func @transform_0(%arg0: i32, %arg1: i32) -> (i32, i32) {
    %c1_i32 = arith.constant 1 : i32
    %0 = arith.muli %arg0, %c1_i32 : i32
    %1 = arith.addi %0, %arg1 : i32
    %c0_i32 = arith.constant 0 : i32
    %c0_i32_0 = arith.constant 0 : i32
    return %1, %c0_i32 : i32, i32
  }
  func.func @transform_1(%arg0: i32, %arg1: i32) -> (i32, i32) {
    %c1_i32 = arith.constant 1 : i32
    %0 = arith.muli %arg0, %c1_i32 : i32
    %1 = arith.addi %0, %arg1 : i32
    %c0_i32 = arith.constant 0 : i32
    %c0_i32_0 = arith.constant 0 : i32
    return %1, %c0_i32 : i32, i32
  }
  func.func @transform_2(%arg0: i32, %arg1: i32) -> (i32, i32, i32, i32) {
    %c0_i32 = arith.constant 0 : i32
    %c0_i32_0 = arith.constant 0 : i32
    %c0_i32_1 = arith.constant 0 : i32
    %c0_i32_2 = arith.constant 0 : i32
    return %arg0, %c0_i32, %c0_i32_0, %c0_i32_1 : i32, i32, i32, i32
  }
}

</mosaic_0001>

<llo_original>
// kernel: tpu_custom_call.1
$region0: #{tpu_custom_call.1}
  #allocation0 [shape = 'u32[]', space=smem, size = 0x4, offset = 0x4, fixed_abs, tag = 'smem constant byte address 0x4 - core index']
  #allocation1 [shape = 'u32[72,128]{1,0:T(1,128)}', space=vmem, size = 0x9000, scoped, tag = 'internal scratch']
  %s0 = inlined_call_operand.hbm [shape: f32[16,128], index: 0, kind: input, shape index: {}]
  %s1 = inlined_call_operand.hbm [shape: f32[16,128], index: 1, kind: input, shape index: {}]
  %s2 = inlined_call_operand.hbm [shape: f32[1,3,8,128], index: 2, kind: output, shape index: {}]
  %s3 = sld [smem:[#allocation0]]
  $region30: #{tpu_custom_call.1} parent=0
    _
  %s5 = ssub.s32 1, %s3
  %s6 = scalar_select 0, %s5, %s3
  $region1: #{tpu_custom_call.1} parent=0
    #allocation2 [shape = 'u8[8192]{0}', space=vmem, size = 0x2000, scoped, tag = 'input window, operand 0, single buffered']
    #allocation3 [shape = 's32[1]{0}', space=sflag, size = 0x4, scoped, tag = 'scoped memory for tpu_custom_call.1']
    #allocation4 [shape = 's32[1]{0}', space=sflag, size = 0x4, scoped, tag = 'scoped memory for tpu_custom_call.1']
    #allocation5 [shape = 'u8[8192]{0}', space=vmem, size = 0x2000, scoped, tag = 'input window, operand 1, single buffered']
    #allocation6 [shape = 's32[1]{0}', space=sflag, size = 0x4, scoped, tag = 'scoped memory for tpu_custom_call.1']
    #allocation7 [shape = 'u8[12288]{0}', space=vmem, size = 0x3000, scoped, tag = 'output window, operand 0, single buffered']
    %7 = vsyncpa [#allocation3], 0
    %8 = vsyncpa [#allocation6], 0
    %9 = vsyncpa [#allocation4], 0
    // Predicated region
    $region2: #{tpu_custom_call.1} parent=1 // pred_check
      _
    $region3: #{tpu_custom_call.1} parent=1 // pred_check_branch
      %11 = sbr.rel (0) target = $region5
    $region4: #{tpu_custom_call.1} parent=1 // pred_region
      %s12 = sadd.s32 0, 0
      %s13 = smul.u32 2, %s12
      %15 = vsyncadd [#allocation3], 0
      %s16 = smul.addr %s13, 8
      %s17 = scalar_lea.hbm %s0, %s16
      %s18 = sshll.u32 %s17, 4
      %s19 = int_to_ptr.hbm [resolvable:$true] %s18
      %s20 = sshll.u32 [#allocation2], 4
      %s21 = int_to_ptr.vmem [resolvable:$true] %s20
      %26 = dma.hbm_to_vmem [thread:$0]  %s19, 256, %s21, [#allocation3], 128, 128, 8
    $region5: #{tpu_custom_call.1} parent=1 // pred_fallthru
      _
    // Predicated region
    $region6: #{tpu_custom_call.1} parent=1 // pred_check
      _
    $region7: #{tpu_custom_call.1} parent=1 // pred_check_branch
      %28 = sbr.rel (0) target = $region9
    $region8: #{tpu_custom_call.1} parent=1 // pred_region
      %s29 = sadd.s32 0, 0
      %s30 = smul.u32 2, %s29
      %32 = vsyncadd [#allocation6], 0
      %s33 = smul.addr %s30, 8
      %s34 = scalar_lea.hbm %s1, %s33
      %s35 = sshll.u32 %s34, 4
      %s36 = int_to_ptr.hbm [resolvable:$true] %s35
      %s37 = sshll.u32 [#allocation5], 4
      %s38 = int_to_ptr.vmem [resolvable:$true] %s37
      %43 = dma.hbm_to_vmem [thread:$0]  %s36, 256, %s38, [#allocation6], 128, 128, 8
    $region9: #{tpu_custom_call.1} parent=1 // pred_fallthru
      _
    // Predicated region
    $region10: #{tpu_custom_call.1} parent=1 // pred_check
      _
    $region11: #{tpu_custom_call.1} parent=1 // pred_check_branch
      %45 = sbr.rel (0) target = $region13
    $region12: #{tpu_custom_call.1} parent=1 // pred_region
      %47 = dma.done [#allocation3], 256
    $region13: #{tpu_custom_call.1} parent=1 // pred_fallthru
      _
    // Predicated region
    $region14: #{tpu_custom_call.1} parent=1 // pred_check
      _
    $region15: #{tpu_custom_call.1} parent=1 // pred_check_branch
      %49 = sbr.rel (0) target = $region17
    $region16: #{tpu_custom_call.1} parent=1 // pred_region
      %51 = dma.done [#allocation6], 256
    $region17: #{tpu_custom_call.1} parent=1 // pred_fallthru
      _
    %s52 = sadd.s32 0, 0
    %s53 = smul.u32 2, %s52
    %s54 = sadd.s32 0, 0
    %s55 = smul.u32 2, %s54
    %p56 = scmp.eq.s32.totalorder 0, 0
    // Predicated region
    $region18: #{tpu_custom_call.1} parent=1 // pred_check
      %p57 = pneg %p56
    $region19: #{tpu_custom_call.1} parent=1 // pred_check_branch
      %59 = sbr.rel (%p57) target = $region21
    $region20: #{tpu_custom_call.1} parent=1 // pred_region
      %60 = vst [vmem:[#allocation7] sm:$0xff] 0.0
      %61 = vst [vmem:[#allocation7 + $0x8] sm:$0xff] 0.0
      %62 = vst [vmem:[#allocation7 + $0x10] sm:$0xff] 0.0
    $region21: #{tpu_custom_call.1} parent=1 // pred_fallthru
      _
    %v63 = vld [vmem:[#allocation2] sm:$0xff]
    %v64 = vld [vmem:[#allocation2 + $0x8] sm:$0xff]
    %v65 = vmul.f32 %v63, 0.5
    %v66 = vmul.f32 %v64, 0.5
    %v67 = vtanh.pop %v65
    %v68 = vtanh.pop %v66
    %v69 = vmul.f32 %v67, 0.5
    %v70 = vmul.f32 %v68, 0.5
    %v71 = vadd.f32 %v69, 0.5
    %v72 = vadd.f32 %v70, 0.5
    %v73 = vld [vmem:[#allocation5] sm:$0xff]
    %v74 = vld [vmem:[#allocation5 + $0x8] sm:$0xff]
    %v75 = vld [vmem:[#allocation7] sm:$0xff]
    %v76 = vmul.f32 %v71, %v73
    %v77 = vmul.f32 %v72, %v74
    %v78 = vadd.f32 %v76, %v77
    %v79 = vadd.f32 %v75, %v78
    %80 = vst [vmem:[#allocation7] sm:$0xff] %v79
    %s81 = scalar_lea.vmem [#allocation7], 8
    %v82 = vld [vmem:[%s81] sm:$0xff]
    %v83 = vadd.f32 %v71, %v72
    %v84 = vadd.f32 %v82, %v83
    %85 = vst [vmem:[%s81] sm:$0xff] %v84
    %s86 = scalar_lea.vmem [#allocation7], 16
    %v87 = vld [vmem:[%s86] sm:$0xff]
    %v88 = vadd.f32 %v73, %v74
    %v89 = vadd.f32 %v87, %v88
    %90 = vst [vmem:[%s86] sm:$0xff] %v89
    // Predicated region
    $region22: #{tpu_custom_call.1} parent=1 // pred_check
      _
    $region23: #{tpu_custom_call.1} parent=1 // pred_check_branch
      %92 = sbr.rel (0) target = $region25
    $region24: #{tpu_custom_call.1} parent=1 // pred_region
      %94 = vsyncadd [#allocation4], 0
      %s95 = sshll.u32 [#allocation7], 4
      %s96 = int_to_ptr.vmem [resolvable:$true] %s95
      %s97 = sshll.u32 %s2, 4
      %s98 = int_to_ptr.hbm [resolvable:$true] %s97
      %103 = dma.vmem_to_hbm [thread:$0]  %s96, 384, %s98, [#allocation4], 128, 128, 8
    $region25: #{tpu_custom_call.1} parent=1 // pred_fallthru
      _
    // Predicated region
    $region26: #{tpu_custom_call.1} parent=1 // pred_check
      _
    $region27: #{tpu_custom_call.1} parent=1 // pred_check_branch
      %105 = sbr.rel (0) target = $region29
    $region28: #{tpu_custom_call.1} parent=1 // pred_region
      %107 = dma.done [#allocation4], 384
    $region29: #{tpu_custom_call.1} parent=1 // pred_fallthru
      _
    %108 = vsyncpa [#allocation3], 1
    %109 = vsyncpa [#allocation6], 1
    %110 = vsyncpa [#allocation4], 1

</llo_original>
